<compile_context>
chip_gen: v5e
topology: v5e:2x2
jax: 0.10.0
libtpu: 0.0.40
codegen_flags: <defaults>
</compile_context>

<pallas_src>
import functools

import jax
import jax.numpy as jnp
import numpy as np
from jax.experimental import pallas as pl
from jax.experimental.pallas import tpu as pltpu


def _round_up(x, m):
    return ((x + m - 1) // m) * m


@functools.lru_cache(maxsize=None)
def _select_tiles_and_vmem():
    """Pick (tm, ti, vmem_limit_bytes) for the local TPU generation."""
    vmem_bytes = None
    try:
        vmem_bytes = int(pltpu.get_tpu_info().vmem_capacity_bytes)
    except Exception:
        vmem_bytes = None
    if vmem_bytes is not None and vmem_bytes >= 100 * 1024 * 1024:
        # v5e / v6e: 128 MiB physical VMEM.
        return 768, 1024, 100 * 1024 * 1024
    # v7x (64 MiB) or unknown: conservative, still MXU-bound for prefill.
    return 512, 1024, 56 * 1024 * 1024


def mlp_kernel(x_ref, wgu_ref, wd_ref, o_ref, acc_ref):
    """One (token-tile i, intermediate-tile k) grid step.

    x_ref:   (tm, H)       token tile in its original dtype (resident over k)
    wgu_ref: (H, 2*ti)     fused [gate | up] weight slice, [in, out] layout
    wd_ref:  (ti, H)       down_proj weight slice, [in, out] layout
    o_ref:   (tm, H)       output tile (resident across the k axis)
    acc_ref: (tm, H)       f32 accumulator scratch
    """
    k = pl.program_id(1)

    @pl.when(k == 0)
    def _():
        acc_ref[...] = jnp.zeros_like(acc_ref)

    compute_dtype = wgu_ref.dtype
    ti = wd_ref.shape[0]

    x = x_ref[...].astype(compute_dtype)
    # Single fused gate+up matmul on the MXU, f32 accumulation.
    gu = jnp.dot(x, wgu_ref[...], preferred_element_type=jnp.float32)
    g = gu[:, :ti]
    u = gu[:, ti:]
    # SiLU gate in f32 (VPU mul + EUP sigmoid); cast only for the down matmul.
    h = (g * jax.nn.sigmoid(g)) * u
    acc_ref[...] += jnp.dot(h.astype(compute_dtype), wd_ref[...],
                            preferred_element_type=jnp.float32)

    @pl.when(k == pl.num_programs(1) - 1)
    def _():
        o_ref[...] = acc_ref[...].astype(o_ref.dtype)


def prepare_mlp_weights(gate_w, up_w, down_w, *, ti=None,
                        compute_dtype=jnp.bfloat16):
    """One-time weight prep, outside the per-call forward path.

    PyTorch nn.Linear layout [out_features, in_features] -> pre-transposed
    [in, out], cast to the bf16 compute dtype, I axis zero-padded to a
    multiple of ti (exact: silu(0)*0 = 0 and padded down rows are zero), and
    gate/up fused per I-block.

    Returns:
      wgu_t: (Kt, H, 2*ti)  block k = [gate cols k*ti:(k+1)*ti | up cols ...]
      wd_t:  (Kt*ti, H)     down_proj in [in, out] layout
    """
    if ti is None:
        _, ti, _ = _select_tiles_and_vmem()

    gate_t = jnp.asarray(gate_w).T.astype(compute_dtype)   # (H, I)
    up_t = jnp.asarray(up_w).T.astype(compute_dtype)       # (H, I)
    down_t = jnp.asarray(down_w).T.astype(compute_dtype)   # (I, H)

    H, I = gate_t.shape
    ti = _round_up(int(ti), 128)
    ti = min(ti, _round_up(I, 128))
    I_pad = _round_up(I, ti)
    if I_pad != I:
        gate_t = jnp.pad(gate_t, ((0, 0), (0, I_pad - I)))
        up_t = jnp.pad(up_t, ((0, 0), (0, I_pad - I)))
        down_t = jnp.pad(down_t, ((0, I_pad - I), (0, 0)))

    kt = I_pad // ti
    gate_blk = gate_t.reshape(H, kt, ti).transpose(1, 0, 2)   # (Kt, H, ti)
    up_blk = up_t.reshape(H, kt, ti).transpose(1, 0, 2)       # (Kt, H, ti)
    wgu_t = jnp.concatenate([gate_blk, up_blk], axis=-1)      # (Kt, H, 2*ti)
    return wgu_t, down_t


@functools.partial(jax.jit, static_argnames=("tm", "vmem_limit_bytes"))
def _mlp_forward_impl(x, wgu_t, wd_t, *, tm, vmem_limit_bytes):
    B, S, H = x.shape
    kt, H_w, two_ti = wgu_t.shape
    if H_w != H:
        raise ValueError(f"weight hidden dim {H_w} != activation hidden dim {H}")
    ti = two_ti // 2
    I_pad = kt * ti

    out_dtype = x.dtype
    M = B * S

    # Effective token tile: never larger than the (padded) token count,
    # sublane-aligned (16 rows for bf16 packing).
    tm_eff = min(tm, _round_up(M, 16))
    M_pad = _round_up(M, tm_eff)

    # Token flatten is a free reshape; pad only if M is not a tile multiple.
    x2d = x.reshape(M, H)
    if M_pad != M:
        x2d = jnp.pad(x2d, ((0, M_pad - M), (0, 0)))

    num_m = M_pad // tm_eff
    grid = (num_m, kt)

    itemsize_w = jnp.dtype(wgu_t.dtype).itemsize
    itemsize_x = jnp.dtype(x.dtype).itemsize
    itemsize_o = jnp.dtype(out_dtype).itemsize
    weight_bytes_per_pass = (H * 2 * I_pad + I_pad * H) * itemsize_w
    cost = pl.CostEstimate(
        flops=6 * M_pad * H * I_pad,                # gate + up + down matmuls
        transcendentals=M_pad * I_pad,              # sigmoid
        bytes_accessed=(M_pad * H * itemsize_x      # activations (resident over k)
                        + num_m * weight_bytes_per_pass   # weights re-streamed per token tile
                        + M_pad * H * itemsize_o),  # output write
    )

    out = pl.pallas_call(
        mlp_kernel,
        out_shape=jax.ShapeDtypeStruct((M_pad, H), out_dtype),
        grid_spec=pltpu.PrefetchScalarGridSpec(
            num_scalar_prefetch=0,
            grid=grid,
            in_specs=[
                pl.BlockSpec((tm_eff, H), lambda i, k: (i, 0)),            # token tile
                pl.BlockSpec((None, H, 2 * ti), lambda i, k: (k, 0, 0)),   # fused [gate|up] slice
                pl.BlockSpec((ti, H), lambda i, k: (k, 0)),                # down_proj slice
            ],
            out_specs=pl.BlockSpec((tm_eff, H), lambda i, k: (i, 0)),
            scratch_shapes=[pltpu.VMEM((tm_eff, H), jnp.float32)],
        ),
        compiler_params=pltpu.CompilerParams(
            dimension_semantics=("parallel", "arbitrary"),
            vmem_limit_bytes=vmem_limit_bytes,
        ),
        cost_estimate=cost,
    )(x2d, wgu_t, wd_t)

    return out[:M].reshape(B, S, H)


def mlp_forward(x, wgu_t, wd_t, *, tm=None, vmem_limit_bytes=None):
    """x: [B, S, H]. wgu_t: (Kt, H, 2*ti) fused weights. wd_t: (Kt*ti, H).
    Returns [B, S, H] in x.dtype."""
    d_tm, _, d_vmem = _select_tiles_and_vmem()
    if tm is None:
        tm = d_tm
    if vmem_limit_bytes is None:
        vmem_limit_bytes = d_vmem
    return _mlp_forward_impl(x, wgu_t, wd_t, tm=int(tm),
                             vmem_limit_bytes=int(vmem_limit_bytes))


def mlp_reference(x, gate_w, up_w, down_w):
    g = jnp.einsum("bsh,ih->bsi", x, gate_w)
    u = jnp.einsum("bsh,ih->bsi", x, up_w)
    h = jax.nn.silu(g) * u
    return jnp.einsum("bsi,hi->bsh", h, down_w)


if __name__ == "__main__":
    # Small SmolLM2-style MLP: hidden_size=128, intermediate_size=256,
    # batch=2, seq=16.
    B, S, H, I = 2, 16, 128, 256

    key = jax.random.PRNGKey(0)
    kx, kg, ku, kd = jax.random.split(key, 4)

    x = jax.random.normal(kx, (B, S, H), dtype=jnp.float32)
    # PyTorch Linear layout: [out_features, in_features]
    gate_w = jax.random.normal(kg, (I, H), dtype=jnp.float32) * (1.0 / np.sqrt(H))
    up_w = jax.random.normal(ku, (I, H), dtype=jnp.float32) * (1.0 / np.sqrt(H))
    down_w = jax.random.normal(kd, (H, I), dtype=jnp.float32) * (1.0 / np.sqrt(I))

    ref = mlp_reference(x, gate_w, up_w, down_w)
    tol = dict(rtol=5e-2, atol=5e-2)  # bf16 matmul inputs, f32 accumulation

    # 1) Default (generation-selected) tiles -- degenerate 1x1 grid at toy shapes.
    wgu_t, wd_t = prepare_mlp_weights(gate_w, up_w, down_w)
    out = jax.block_until_ready(mlp_forward(x, wgu_t, wd_t))
    np.testing.assert_allclose(np.asarray(out), np.asarray(ref), **tol)

    # 2) Small tiles to exercise the 2-D grid: 2 token tiles x 2 I-axis
    #    accumulation steps through the f32 scratch (ti=128 at prepare time).
    wgu_s, wd_s = prepare_mlp_weights(gate_w, up_w, down_w, ti=128)
    out_tiled = jax.block_until_ready(mlp_forward(x, wgu_s, wd_s, tm=16))
    np.testing.assert_allclose(np.asarray(out_tiled), np.asarray(ref), **tol)

    # 3) Odd token count (M not a multiple of the tile) to exercise M-padding.
    x_odd = x[:, :9, :]
    ref_odd = mlp_reference(x_odd, gate_w, up_w, down_w)
    out_odd = jax.block_until_ready(mlp_forward(x_odd, wgu_t, wd_t))
    np.testing.assert_allclose(np.asarray(out_odd), np.asarray(ref_odd), **tol)

    # 4) Intermediate size not a multiple of 128 to exercise exact I-padding.
    I2 = 320
    kg2, ku2, kd2 = jax.random.split(jax.random.PRNGKey(1), 3)
    gate2 = jax.random.normal(kg2, (I2, H), dtype=jnp.float32) * (1.0 / np.sqrt(H))
    up2 = jax.random.normal(ku2, (I2, H), dtype=jnp.float32) * (1.0 / np.sqrt(H))
    down2 = jax.random.normal(kd2, (H, I2), dtype=jnp.float32) * (1.0 / np.sqrt(I2))
    wgu2, wd2 = prepare_mlp_weights(gate2, up2, down2)
    ref2 = mlp_reference(x, gate2, up2, down2)
    out2 = jax.block_until_ready(mlp_forward(x, wgu2, wd2))
    np.testing.assert_allclose(np.asarray(out2), np.asarray(ref2), **tol)

    print("KERNEL_OK")
</pallas_src>

<mosaic_0001>
module attributes {stable_mosaic.version = 11 : i64} {
  func.func @mlp_kernel(%arg0: i32, %arg1: i32, %arg2: memref<32x128xf32, #tpu.memory_space<vmem>>, %arg3: memref<1x128x512xbf16, #tpu.memory_space<vmem>>, %arg4: memref<256x128xbf16, #tpu.memory_space<vmem>>, %arg5: memref<32x128xf32, #tpu.memory_space<vmem>>, %arg6: memref<32x128xf32, #tpu.memory_space<vmem>>) attributes {dimension_semantics = [#tpu.dimension_semantics<parallel>, #tpu.dimension_semantics<arbitrary>], iteration_bounds = array<i64: 1, 1>, scalar_prefetch = 0 : i64, scratch_operands = 1 : i64, tpu.core_type = #tpu.core_type<tc>, window_params = [{transform_indices = @transform_0, window_bounds = array<i64: 32, 128>}, {transform_indices = @transform_1, window_bounds = array<i64: 1, 128, 512>}, {transform_indices = @transform_2, window_bounds = array<i64: 256, 128>}, {transform_indices = @transform_3, window_bounds = array<i64: 32, 128>}]} {
    %c0_i32 = arith.constant 0 : i32
    %0 = arith.cmpi eq, %arg1, %c0_i32 : i32
    %1 = arith.extui %0 : i1 to i32
    %c0_i32_0 = arith.constant 0 : i32
    %2 = arith.cmpi ne, %1, %c0_i32_0 : i32
    scf.if %2 {
      %cst_15 = arith.constant 0.000000e+00 : f32
      %26 = vector.broadcast %cst_15 : f32 to vector<32x128xf32>
      %c0_16 = arith.constant 0 : index
      %c0_17 = arith.constant 0 : index
      %27 = vector.load %arg6[%c0_16, %c0_17] : memref<32x128xf32, #tpu.memory_space<vmem>>, vector<32x128xf32>
      tpu.vector_store %arg6[%c0_16, %c0_17], %26 {strides = array<i32>} : memref<32x128xf32, #tpu.memory_space<vmem>>, vector<32x128xf32>,
    } else {
    }
    %c0 = arith.constant 0 : index
    %c0_1 = arith.constant 0 : index
    %3 = vector.load %arg2[%c0, %c0_1] : memref<32x128xf32, #tpu.memory_space<vmem>>, vector<32x128xf32>
    %4 = arith.truncf %3 : vector<32x128xf32> to vector<32x128xbf16>
    %c0_2 = arith.constant 0 : index
    %c0_3 = arith.constant 0 : index
    %c0_4 = arith.constant 0 : index
    %5 = vector.load %arg3[%c0_2, %c0_3, %c0_4] : memref<1x128x512xbf16, #tpu.memory_space<vmem>>, vector<1x128x512xbf16>
    %6 = vector.shape_cast %5 : vector<1x128x512xbf16> to vector<128x512xbf16>
    %cst = arith.constant dense<0.000000e+00> : vector<32x512xf32>
    %7 = tpu.matmul %4, %6, %cst {dimension_numbers = #tpu.dot_dimension_numbers<[1], [0], [0], [1], [0, 0, 1, 1], [], []>} : vector<32x128xbf16>, vector<128x512xbf16>, vector<32x512xf32> -> vector<32x512xf32>
    %8 = vector.extract_strided_slice %7 {offsets = [0, 0], sizes = [32, 256], strides = [1, 1]} : vector<32x512xf32> to vector<32x256xf32>
    %9 = vector.extract_strided_slice %7 {offsets = [0, 256], sizes = [32, 256], strides = [1, 1]} : vector<32x512xf32> to vector<32x256xf32>
    %10 = arith.negf %8 : vector<32x256xf32>
    %11 = math.exp %10 : vector<32x256xf32>
    %cst_5 = arith.constant 1.000000e+00 : f32
    %12 = vector.broadcast %cst_5 : f32 to vector<32x256xf32>
    %13 = arith.addf %12, %11 : vector<32x256xf32>
    %14 = arith.divf %12, %13 : vector<32x256xf32>
    %15 = arith.mulf %8, %14 : vector<32x256xf32>
    %16 = arith.mulf %15, %9 : vector<32x256xf32>
    %c0_6 = arith.constant 0 : index
    %c0_7 = arith.constant 0 : index
    %17 = vector.load %arg6[%c0_6, %c0_7] : memref<32x128xf32, #tpu.memory_space<vmem>>, vector<32x128xf32>
    %18 = arith.truncf %16 : vector<32x256xf32> to vector<32x256xbf16>
    %c0_8 = arith.constant 0 : index
    %c0_9 = arith.constant 0 : index
    %19 = vector.load %arg4[%c0_8, %c0_9] : memref<256x128xbf16, #tpu.memory_space<vmem>>, vector<256x128xbf16>
    %cst_10 = arith.constant dense<0.000000e+00> : vector<32x128xf32>
    %20 = tpu.matmul %18, %19, %cst_10 {dimension_numbers = #tpu.dot_dimension_numbers<[1], [0], [0], [1], [0, 0, 1, 1], [], []>} : vector<32x256xbf16>, vector<256x128xbf16>, vector<32x128xf32> -> vector<32x128xf32>
    %21 = arith.addf %17, %20 : vector<32x128xf32>
    %c0_11 = arith.constant 0 : index
    %c0_12 = arith.constant 0 : index
    %22 = vector.load %arg6[%c0_11, %c0_12] : memref<32x128xf32, #tpu.memory_space<vmem>>, vector<32x128xf32>
    tpu.vector_store %arg6[%c0_11, %c0_12], %21 {strides = array<i32>} : memref<32x128xf32, #tpu.memory_space<vmem>>, vector<32x128xf32>,
    %c0_i32_13 = arith.constant 0 : i32
    %23 = arith.cmpi eq, %arg1, %c0_i32_13 : i32
    %24 = arith.extui %23 : i1 to i32
    %c0_i32_14 = arith.constant 0 : i32
    %25 = arith.cmpi ne, %24, %c0_i32_14 : i32
    scf.if %25 {
      %c0_15 = arith.constant 0 : index
      %c0_16 = arith.constant 0 : index
      %26 = vector.load %arg6[%c0_15, %c0_16] : memref<32x128xf32, #tpu.memory_space<vmem>>, vector<32x128xf32>
      %c0_17 = arith.constant 0 : index
      %c0_18 = arith.constant 0 : index
      %27 = vector.load %arg5[%c0_17, %c0_18] : memref<32x128xf32, #tpu.memory_space<vmem>>, vector<32x128xf32>
      tpu.vector_store %arg5[%c0_17, %c0_18], %26 {strides = array<i32>} : memref<32x128xf32, #tpu.memory_space<vmem>>, vector<32x128xf32>,
    } else {
    }
    return
  }
  func.func @transform_0(%arg0: i32, %arg1: i32) -> (i32, i32) {
    %c0_i32 = arith.constant 0 : i32
    %c0_i32_0 = arith.constant 0 : i32
    return %arg0, %c0_i32 : i32, i32
  }
  func.func @transform_1(%arg0: i32, %arg1: i32) -> (i32, i32, i32) {
    %c0_i32 = arith.constant 0 : i32
    %c0_i32_0 = arith.constant 0 : i32
    %c0_i32_1 = arith.constant 0 : i32
    return %arg1, %c0_i32, %c0_i32_0 : i32, i32, i32
  }
  func.func @transform_2(%arg0: i32, %arg1: i32) -> (i32, i32) {
    %c0_i32 = arith.constant 0 : i32
    %c0_i32_0 = arith.constant 0 : i32
    return %arg1, %c0_i32 : i32, i32
  }
  func.func @transform_3(%arg0: i32, %arg1: i32) -> (i32, i32) {
    %c0_i32 = arith.constant 0 : i32
    %c0_i32_0 = arith.constant 0 : i32
    return %arg0, %c0_i32 : i32, i32
  }
}

</mosaic_0001>

<llo_original>
// kernel: _mlp_forward_impl.1
$region0: #{_mlp_forward_impl.1}
  #allocation0 [shape = 'u32[]', space=smem, size = 0x4, offset = 0x4, fixed_abs, tag = 'smem constant byte address 0x4 - core index']
  #allocation1 [shape = 'u32[72,128]{1,0:T(1,128)}', space=vmem, size = 0x9000, scoped, tag = 'internal scratch']
  #allocation2 [shape = 'f32[32,128]{1,0:T(8,128)}', space=vmem, size = 0x4000, scoped, tag = 'scratch operand']
  %s0 = inlined_call_operand.hbm [shape: f32[32,128], index: 0, kind: input, shape index: {}]
  %s1 = inlined_call_operand.hbm [shape: bf16[1,128,512], index: 1, kind: input, shape index: {}]
  %s2 = inlined_call_operand.hbm [shape: bf16[256,128], index: 2, kind: input, shape index: {}]
  %s3 = inlined_call_operand.hbm [shape: f32[32,128], index: 3, kind: output, shape index: {}]
  %s4 = sld [smem:[#allocation0]]
  $region42: #{_mlp_forward_impl.1} parent=0
    _
  %s6 = ssub.s32 1, %s4
  %s7 = scalar_select 0, %s6, %s4
  $region1: #{_mlp_forward_impl.1} parent=0
    #allocation3 [shape = 'u8[16384]{0}', space=vmem, size = 0x4000, scoped, tag = 'input window, operand 0, single buffered']
    #allocation4 [shape = 's32[1]{0}', space=sflag, size = 0x4, scoped, tag = 'scoped memory for _mlp_forward_impl.1']
    #allocation5 [shape = 's32[1]{0}', space=sflag, size = 0x4, scoped, tag = 'scoped memory for _mlp_forward_impl.1']
    #allocation6 [shape = 'u8[131072]{0}', space=vmem, size = 0x20000, scoped, tag = 'input window, operand 1, single buffered']
    #allocation7 [shape = 's32[1]{0}', space=sflag, size = 0x4, scoped, tag = 'scoped memory for _mlp_forward_impl.1']
    #allocation8 [shape = 'u8[65536]{0}', space=vmem, size = 0x10000, scoped, tag = 'input window, operand 2, single buffered']
    #allocation9 [shape = 'u8[16384]{0}', space=vmem, size = 0x4000, scoped, tag = 'output window, operand 0, single buffered']
    %8 = vsyncpa [#allocation4], 0
    %9 = vsyncpa [#allocation7], 0
    %10 = vsyncpa [#allocation5], 0
    // Predicated region
    $region2: #{_mlp_forward_impl.1} parent=1 // pred_check
      _
    $region3: #{_mlp_forward_impl.1} parent=1 // pred_check_branch
      %12 = sbr.rel (0) target = $region5
    $region4: #{_mlp_forward_impl.1} parent=1 // pred_region
      %14 = vsyncadd [#allocation4], 0
      %s15 = sshll.u32 %s0, 4
      %s16 = int_to_ptr.hbm [resolvable:$true] %s15
      %s17 = sshll.u32 [#allocation3], 4
      %s18 = int_to_ptr.vmem [resolvable:$true] %s17
      %23 = dma.hbm_to_vmem [thread:$0]  %s16, 512, %s18, [#allocation4], 128, 128, 8
    $region5: #{_mlp_forward_impl.1} parent=1 // pred_fallthru
      _
    // Predicated region
    $region6: #{_mlp_forward_impl.1} parent=1 // pred_check
      _
    $region7: #{_mlp_forward_impl.1} parent=1 // pred_check_branch
      %25 = sbr.rel (0) target = $region9
    $region8: #{_mlp_forward_impl.1} parent=1 // pred_region
      %27 = vsyncadd [#allocation7], 0
      %s28 = sshll.u32 %s1, 4
      %s29 = int_to_ptr.hbm [resolvable:$true] %s28
      %s30 = sshll.u32 [#allocation6], 4
      %s31 = int_to_ptr.vmem [resolvable:$true] %s30
      %36 = dma.hbm_to_vmem [thread:$0]  %s29, 4096, %s31, [#allocation7], 256, 256, 16
    $region9: #{_mlp_forward_impl.1} parent=1 // pred_fallthru
      _
    // Predicated region
    $region10: #{_mlp_forward_impl.1} parent=1 // pred_check
      _
    $region11: #{_mlp_forward_impl.1} parent=1 // pred_check_branch
      %38 = sbr.rel (0) target = $region13
    $region12: #{_mlp_forward_impl.1} parent=1 // pred_region
      %40 = vsyncadd [#allocation7], 0
      %s41 = sshll.u32 %s2, 4
      %s42 = int_to_ptr.hbm [resolvable:$true] %s41
      %s43 = sshll.u32 [#allocation8], 4
      %s44 = int_to_ptr.vmem [resolvable:$true] %s43
      %49 = dma.hbm_to_vmem [thread:$0]  %s42, 2048, %s44, [#allocation7], 64, 64, 4
    $region13: #{_mlp_forward_impl.1} parent=1 // pred_fallthru
      _
    // Predicated region
    $region14: #{_mlp_forward_impl.1} parent=1 // pred_check
      _
    $region15: #{_mlp_forward_impl.1} parent=1 // pred_check_branch
      %51 = sbr.rel (0) target = $region17
    $region16: #{_mlp_forward_impl.1} parent=1 // pred_region
      %53 = dma.done [#allocation4], 512
    $region17: #{_mlp_forward_impl.1} parent=1 // pred_fallthru
      _
    // Predicated region
    $region18: #{_mlp_forward_impl.1} parent=1 // pred_check
      _
    $region19: #{_mlp_forward_impl.1} parent=1 // pred_check_branch
      %55 = sbr.rel (0) target = $region21
    $region20: #{_mlp_forward_impl.1} parent=1 // pred_region
      %57 = dma.done [#allocation7], 4096
    $region21: #{_mlp_forward_impl.1} parent=1 // pred_fallthru
      _
    // Predicated region
    $region22: #{_mlp_forward_impl.1} parent=1 // pred_check
      _
    $region23: #{_mlp_forward_impl.1} parent=1 // pred_check_branch
      %59 = sbr.rel (0) target = $region25
    $region24: #{_mlp_forward_impl.1} parent=1 // pred_region
      %61 = dma.done [#allocation7], 2048
    $region25: #{_mlp_forward_impl.1} parent=1 // pred_fallthru
      _
    %p62 = scmp.eq.s32.totalorder 0, 0
    // Predicated region
    $region26: #{_mlp_forward_impl.1} parent=1 // pred_check
      %p63 = pneg %p62
    $region27: #{_mlp_forward_impl.1} parent=1 // pred_check_branch
      %65 = sbr.rel (%p63) target = $region29
    $region28: #{_mlp_forward_impl.1} parent=1 // pred_region
      %66 = vst [vmem:[#allocation2] sm:$0xff] 0.0
      %67 = vst [vmem:[#allocation2 + $0x8] sm:$0xff] 0.0
      %68 = vst [vmem:[#allocation2 + $0x10] sm:$0xff] 0.0
      %69 = vst [vmem:[#allocation2 + $0x18] sm:$0xff] 0.0
    $region29: #{_mlp_forward_impl.1} parent=1 // pred_fallthru
      _
    %v70 = vld [vmem:[#allocation3] sm:$0xff]
    %v71 = vld [vmem:[#allocation3 + $0x8] sm:$0xff]
    %v72 = vld [vmem:[#allocation3 + $0x10] sm:$0xff]
    %v73 = vld [vmem:[#allocation3 + $0x18] sm:$0xff]
    %v74 = vpack.c.bf16 %v71, %v70
    %v75 = vpack.c.bf16 %v73, %v72
    %v76 = vld [vmem:[#allocation6] sm:$0xff]
    %v77 = vld [vmem:[#allocation6 + $0x8] sm:$0xff]
    %v78 = vld [vmem:[#allocation6 + $0x10] sm:$0xff]
    %v79 = vld [vmem:[#allocation6 + $0x18] sm:$0xff]
    %v80 = vld [vmem:[#allocation6 + $0x20] sm:$0xff]
    %v81 = vld [vmem:[#allocation6 + $0x28] sm:$0xff]
    %v82 = vld [vmem:[#allocation6 + $0x30] sm:$0xff]
    %v83 = vld [vmem:[#allocation6 + $0x38] sm:$0xff]
    %v84 = vld [vmem:[#allocation6 + $0x40] sm:$0xff]
    %v85 = vld [vmem:[#allocation6 + $0x48] sm:$0xff]
    %v86 = vld [vmem:[#allocation6 + $0x50] sm:$0xff]
    %v87 = vld [vmem:[#allocation6 + $0x58] sm:$0xff]
    %v88 = vld [vmem:[#allocation6 + $0x60] sm:$0xff]
    %v89 = vld [vmem:[#allocation6 + $0x68] sm:$0xff]
    %v90 = vld [vmem:[#allocation6 + $0x70] sm:$0xff]
    %v91 = vld [vmem:[#allocation6 + $0x78] sm:$0xff]
    %v92 = vld [vmem:[#allocation6 + $0x80] sm:$0xff]
    %v93 = vld [vmem:[#allocation6 + $0x88] sm:$0xff]
    %v94 = vld [vmem:[#allocation6 + $0x90] sm:$0xff]
    %v95 = vld [vmem:[#allocation6 + $0x98] sm:$0xff]
    %v96 = vld [vmem:[#allocation6 + $0xa0] sm:$0xff]
    %v97 = vld [vmem:[#allocation6 + $0xa8] sm:$0xff]
    %v98 = vld [vmem:[#allocation6 + $0xb0] sm:$0xff]
    %v99 = vld [vmem:[#allocation6 + $0xb8] sm:$0xff]
    %v100 = vld [vmem:[#allocation6 + $0xc0] sm:$0xff]
    %v101 = vld [vmem:[#allocation6 + $0xc8] sm:$0xff]
    %v102 = vld [vmem:[#allocation6 + $0xd0] sm:$0xff]
    %v103 = vld [vmem:[#allocation6 + $0xd8] sm:$0xff]
    %v104 = vld [vmem:[#allocation6 + $0xe0] sm:$0xff]
    %v105 = vld [vmem:[#allocation6 + $0xe8] sm:$0xff]
    %v106 = vld [vmem:[#allocation6 + $0xf0] sm:$0xff]
    %v107 = vld [vmem:[#allocation6 + $0xf8] sm:$0xff]
    %v140 = vunpack.c.l.b16 %v76
    %v141 = vunpack.c.h.b16 %v76
    %v142 = vunpack.c.l.b16 %v77
    %v143 = vunpack.c.h.b16 %v77
    %v144 = vunpack.c.l.b16 %v78
    %v145 = vunpack.c.h.b16 %v78
    %v146 = vunpack.c.l.b16 %v79
    %v147 = vunpack.c.h.b16 %v79
    %v148 = vunpack.c.l.b16 %v80
    %v149 = vunpack.c.h.b16 %v80
    %v150 = vunpack.c.l.b16 %v81
    %v151 = vunpack.c.h.b16 %v81
    %v152 = vunpack.c.l.b16 %v82
    %v153 = vunpack.c.h.b16 %v82
    %v154 = vunpack.c.l.b16 %v83
    %v155 = vunpack.c.h.b16 %v83
    %v156 = vunpack.c.l.b16 %v84
    %v157 = vunpack.c.h.b16 %v84
    %v158 = vunpack.c.l.b16 %v85
    %v159 = vunpack.c.h.b16 %v85
    %v160 = vunpack.c.l.b16 %v86
    %v161 = vunpack.c.h.b16 %v86
    %v162 = vunpack.c.l.b16 %v87
    %v163 = vunpack.c.h.b16 %v87
    %v164 = vunpack.c.l.b16 %v88
    %v165 = vunpack.c.h.b16 %v88
    %v166 = vunpack.c.l.b16 %v89
    %v167 = vunpack.c.h.b16 %v89
    %v168 = vunpack.c.l.b16 %v90
    %v169 = vunpack.c.h.b16 %v90
    %v170 = vunpack.c.l.b16 %v91
    %v171 = vunpack.c.h.b16 %v91
    %v172 = vunpack.c.l.b16 %v92
    %v173 = vunpack.c.h.b16 %v92
    %v174 = vunpack.c.l.b16 %v93
    %v175 = vunpack.c.h.b16 %v93
    %v176 = vunpack.c.l.b16 %v94
    %v177 = vunpack.c.h.b16 %v94
    %v178 = vunpack.c.l.b16 %v95
    %v179 = vunpack.c.h.b16 %v95
    %v180 = vunpack.c.l.b16 %v96
    %v181 = vunpack.c.h.b16 %v96
    %v182 = vunpack.c.l.b16 %v97
    %v183 = vunpack.c.h.b16 %v97
    %v184 = vunpack.c.l.b16 %v98
    %v185 = vunpack.c.h.b16 %v98
    %v186 = vunpack.c.l.b16 %v99
    %v187 = vunpack.c.h.b16 %v99
    %v188 = vunpack.c.l.b16 %v100
    %v189 = vunpack.c.h.b16 %v100
    %v190 = vunpack.c.l.b16 %v101
    %v191 = vunpack.c.h.b16 %v101
    %v192 = vunpack.c.l.b16 %v102
    %v193 = vunpack.c.h.b16 %v102
    %v194 = vunpack.c.l.b16 %v103
    %v195 = vunpack.c.h.b16 %v103
    %v196 = vunpack.c.l.b16 %v104
    %v197 = vunpack.c.h.b16 %v104
    %v198 = vunpack.c.l.b16 %v105
    %v199 = vunpack.c.h.b16 %v105
    %v200 = vunpack.c.l.b16 %v106
    %v201 = vunpack.c.h.b16 %v106
    %v202 = vunpack.c.l.b16 %v107
    %v203 = vunpack.c.h.b16 %v107
    %v204 = vpack.c.b16 %v144, %v140
    %v205 = vpack.c.b16 %v145, %v141
    %v206 = vpack.c.b16 %v146, %v142
    %v207 = vpack.c.b16 %v147, %v143
    %v208 = vpack.c.b16 %v152, %v148
    %v209 = vpack.c.b16 %v153, %v149
    %v210 = vpack.c.b16 %v154, %v150
    %v211 = vpack.c.b16 %v155, %v151
    %v212 = vpack.c.b16 %v160, %v156
    %v213 = vpack.c.b16 %v161, %v157
    %v214 = vpack.c.b16 %v162, %v158
    %v215 = vpack.c.b16 %v163, %v159
    %v216 = vpack.c.b16 %v168, %v164
    %v217 = vpack.c.b16 %v169, %v165
    %v218 = vpack.c.b16 %v170, %v166
    %v219 = vpack.c.b16 %v171, %v167
    %v220 = vpack.c.b16 %v176, %v172
    %v221 = vpack.c.b16 %v177, %v173
    %v222 = vpack.c.b16 %v178, %v174
    %v223 = vpack.c.b16 %v179, %v175
    %v224 = vpack.c.b16 %v184, %v180
    %v225 = vpack.c.b16 %v185, %v181
    %v226 = vpack.c.b16 %v186, %v182
    %v227 = vpack.c.b16 %v187, %v183
    %v228 = vpack.c.b16 %v192, %v188
    %v229 = vpack.c.b16 %v193, %v189
    %v230 = vpack.c.b16 %v194, %v190
    %v231 = vpack.c.b16 %v195, %v191
    %v232 = vpack.c.b16 %v200, %v196
    %v233 = vpack.c.b16 %v201, %v197
    %v234 = vpack.c.b16 %v202, %v198
    %v235 = vpack.c.b16 %v203, %v199
    %268 = vmatpush.bf16.msra.mxu0 %v232
    %269 = vmatpush.bf16.msra.mxu0 %v228
    %270 = vmatpush.bf16.msra.mxu0 %v224
    %271 = vmatpush.bf16.msra.mxu0 %v220
    %272 = vmatpush.bf16.msra.mxu0 %v216
    %273 = vmatpush.bf16.msra.mxu0 %v212
    %274 = vmatpush.bf16.msra.mxu0 %v208
    %275 = vmatpush.bf16.msra.mxu0 %v204
    %276 = vmatmul.bf16.gmra.mxu0 %v74
    %v277 = vpop.f32.mrf.mxu0
    %v278 = vadd.f32 0.0, %v277
    %v279 = vpop.f32.mrf.mxu0
    %v280 = vadd.f32 0.0, %v279
    %281 = vmatmul.bf16.gmra.mxu0 %v75
    %v282 = vpop.f32.mrf.mxu0
    %v283 = vadd.f32 0.0, %v282
    %v284 = vpop.f32.mrf.mxu0
    %v285 = vadd.f32 0.0, %v284
    %286 = vdwg.mxu0
    %287 = vmatpush.bf16.msra.mxu0 %v233
    %288 = vmatpush.bf16.msra.mxu0 %v229
    %289 = vmatpush.bf16.msra.mxu0 %v225
    %290 = vmatpush.bf16.msra.mxu0 %v221
    %291 = vmatpush.bf16.msra.mxu0 %v217
    %292 = vmatpush.bf16.msra.mxu0 %v213
    %293 = vmatpush.bf16.msra.mxu0 %v209
    %294 = vmatpush.bf16.msra.mxu0 %v205
    %295 = vmatmul.bf16.gmra.mxu0 %v74
    %v296 = vpop.f32.mrf.mxu0
    %v297 = vadd.f32 0.0, %v296
    %v298 = vpop.f32.mrf.mxu0
    %v299 = vadd.f32 0.0, %v298
    %300 = vmatmul.bf16.gmra.mxu0 %v75
    %v301 = vpop.f32.mrf.mxu0
    %v302 = vadd.f32 0.0, %v301
    %v303 = vpop.f32.mrf.mxu0
    %v304 = vadd.f32 0.0, %v303
    %305 = vdwg.mxu0
    %306 = vmatpush.bf16.msra.mxu0 %v234
    %307 = vmatpush.bf16.msra.mxu0 %v230
    %308 = vmatpush.bf16.msra.mxu0 %v226
    %309 = vmatpush.bf16.msra.mxu0 %v222
    %310 = vmatpush.bf16.msra.mxu0 %v218
    %311 = vmatpush.bf16.msra.mxu0 %v214
    %312 = vmatpush.bf16.msra.mxu0 %v210
    %313 = vmatpush.bf16.msra.mxu0 %v206
    %314 = vmatmul.bf16.gmra.mxu0 %v74
    %v315 = vpop.f32.mrf.mxu0
    %v316 = vadd.f32 0.0, %v315
    %v317 = vpop.f32.mrf.mxu0
    %v318 = vadd.f32 0.0, %v317
    %319 = vmatmul.bf16.gmra.mxu0 %v75
    %v320 = vpop.f32.mrf.mxu0
    %v321 = vadd.f32 0.0, %v320
    %v322 = vpop.f32.mrf.mxu0
    %v323 = vadd.f32 0.0, %v322
    %324 = vdwg.mxu0
    %325 = vmatpush.bf16.msra.mxu0 %v235
    %326 = vmatpush.bf16.msra.mxu0 %v231
    %327 = vmatpush.bf16.msra.mxu0 %v227
    %328 = vmatpush.bf16.msra.mxu0 %v223
    %329 = vmatpush.bf16.msra.mxu0 %v219
    %330 = vmatpush.bf16.msra.mxu0 %v215
    %331 = vmatpush.bf16.msra.mxu0 %v211
    %332 = vmatpush.bf16.msra.mxu0 %v207
    %333 = vmatmul.bf16.gmra.mxu0 %v74
    %v334 = vpop.f32.mrf.mxu0
    %v335 = vadd.f32 0.0, %v334
    %v336 = vpop.f32.mrf.mxu0
    %v337 = vadd.f32 0.0, %v336
    %338 = vmatmul.bf16.gmra.mxu0 %v75
    %v339 = vpop.f32.mrf.mxu0
    %v340 = vadd.f32 0.0, %v339
    %v341 = vpop.f32.mrf.mxu0
    %v342 = vadd.f32 0.0, %v341
    %343 = vdwg.mxu0
    %v344 = vxor.u32 %v278, 2147483648
    %v345 = vxor.u32 %v297, 2147483648
    %v346 = vxor.u32 %v280, 2147483648
    %v347 = vxor.u32 %v299, 2147483648
    %v348 = vxor.u32 %v283, 2147483648
    %v349 = vxor.u32 %v302, 2147483648
    %v350 = vxor.u32 %v285, 2147483648
    %v351 = vxor.u32 %v304, 2147483648
    %v352 = vmul.f32 %v344, 1.442695
    %v353 = vpow.pop %v352
    %v354 = vmul.f32 %v345, 1.442695
    %v355 = vpow.pop %v354
    %v356 = vmul.f32 %v346, 1.442695
    %v357 = vpow.pop %v356
    %v358 = vmul.f32 %v347, 1.442695
    %v359 = vpow.pop %v358
    %v360 = vmul.f32 %v348, 1.442695
    %v361 = vpow.pop %v360
    %v362 = vmul.f32 %v349, 1.442695
    %v363 = vpow.pop %v362
    %v364 = vmul.f32 %v350, 1.442695
    %v365 = vpow.pop %v364
    %v366 = vmul.f32 %v351, 1.442695
    %v367 = vpow.pop %v366
    %v368 = vadd.f32 %v353, 1.0
    %v369 = vadd.f32 %v355, 1.0
    %v370 = vadd.f32 %v357, 1.0
    %v371 = vadd.f32 %v359, 1.0
    %v372 = vadd.f32 %v361, 1.0
    %v373 = vadd.f32 %v363, 1.0
    %v374 = vadd.f32 %v365, 1.0
    %v375 = vadd.f32 %v367, 1.0
    %v376 = vrcp.pop %v368
    %v377 = vmul.f32 %v368, %v376
    %v378 = vsub.f32 1.0, %v377
    %v379 = vmul.f32 %v376, %v378
    %v380 = vadd.f32 %v376, %v379
    %vm381 = vweird.f32 %v368
    %vm382 = vweird.f32 %v376
    %vm383 = vmor %vm381, %vm382
    %v384 = vsel %vm383, %v376, %v380
    %v385 = vand.u32 2147483647, %v368
    %vm386 = vcmp.eq.f32.partialorder %v385, 8.507059e+37
    %v387 = vand.u32 %v368, 2147483648
    %v388 = vor.u32 1.1754944e-38, %v387
    %v389 = vsel %vm386, %v388, %v384
    %v390 = vmul.f32 1.0, %v389
    %v391 = vrcp.pop %v369
    %v392 = vmul.f32 %v369, %v391
    %v393 = vsub.f32 1.0, %v392
    %v394 = vmul.f32 %v391, %v393
    %v395 = vadd.f32 %v391, %v394
    %vm396 = vweird.f32 %v369
    %vm397 = vweird.f32 %v391
    %vm398 = vmor %vm396, %vm397
    %v399 = vsel %vm398, %v391, %v395
    %v400 = vand.u32 2147483647, %v369
    %vm401 = vcmp.eq.f32.partialorder %v400, 8.507059e+37
    %v402 = vand.u32 %v369, 2147483648
    %v403 = vor.u32 1.1754944e-38, %v402
    %v404 = vsel %vm401, %v403, %v399
    %v405 = vmul.f32 1.0, %v404
    %v406 = vrcp.pop %v370
    %v407 = vmul.f32 %v370, %v406
    %v408 = vsub.f32 1.0, %v407
    %v409 = vmul.f32 %v406, %v408
    %v410 = vadd.f32 %v406, %v409
    %vm411 = vweird.f32 %v370
    %vm412 = vweird.f32 %v406
    %vm413 = vmor %vm411, %vm412
    %v414 = vsel %vm413, %v406, %v410
    %v415 = vand.u32 2147483647, %v370
    %vm416 = vcmp.eq.f32.partialorder %v415, 8.507059e+37
    %v417 = vand.u32 %v370, 2147483648
    %v418 = vor.u32 1.1754944e-38, %v417
    %v419 = vsel %vm416, %v418, %v414
    %v420 = vmul.f32 1.0, %v419
    %v421 = vrcp.pop %v371
    %v422 = vmul.f32 %v371, %v421
    %v423 = vsub.f32 1.0, %v422
    %v424 = vmul.f32 %v421, %v423
    %v425 = vadd.f32 %v421, %v424
    %vm426 = vweird.f32 %v371
    %vm427 = vweird.f32 %v421
    %vm428 = vmor %vm426, %vm427
    %v429 = vsel %vm428, %v421, %v425
    %v430 = vand.u32 2147483647, %v371
    %vm431 = vcmp.eq.f32.partialorder %v430, 8.507059e+37
    %v432 = vand.u32 %v371, 2147483648
    %v433 = vor.u32 1.1754944e-38, %v432
    %v434 = vsel %vm431, %v433, %v429
    %v435 = vmul.f32 1.0, %v434
    %v436 = vrcp.pop %v372
    %v437 = vmul.f32 %v372, %v436
    %v438 = vsub.f32 1.0, %v437
    %v439 = vmul.f32 %v436, %v438
    %v440 = vadd.f32 %v436, %v439
    %vm441 = vweird.f32 %v372
    %vm442 = vweird.f32 %v436
    %vm443 = vmor %vm441, %vm442
    %v444 = vsel %vm443, %v436, %v440
    %v445 = vand.u32 2147483647, %v372
    %vm446 = vcmp.eq.f32.partialorder %v445, 8.507059e+37
    %v447 = vand.u32 %v372, 2147483648
    %v448 = vor.u32 1.1754944e-38, %v447
    %v449 = vsel %vm446, %v448, %v444
    %v450 = vmul.f32 1.0, %v449
    %v451 = vrcp.pop %v373
    %v452 = vmul.f32 %v373, %v451
    %v453 = vsub.f32 1.0, %v452
    %v454 = vmul.f32 %v451, %v453
    %v455 = vadd.f32 %v451, %v454
    %vm456 = vweird.f32 %v373
    %vm457 = vweird.f32 %v451
    %vm458 = vmor %vm456, %vm457
    %v459 = vsel %vm458, %v451, %v455
    %v460 = vand.u32 2147483647, %v373
    %vm461 = vcmp.eq.f32.partialorder %v460, 8.507059e+37
    %v462 = vand.u32 %v373, 2147483648
    %v463 = vor.u32 1.1754944e-38, %v462
    %v464 = vsel %vm461, %v463, %v459
    %v465 = vmul.f32 1.0, %v464
    %v466 = vrcp.pop %v374
    %v467 = vmul.f32 %v374, %v466
    %v468 = vsub.f32 1.0, %v467
    %v469 = vmul.f32 %v466, %v468
    %v470 = vadd.f32 %v466, %v469
    %vm471 = vweird.f32 %v374
    %vm472 = vweird.f32 %v466
    %vm473 = vmor %vm471, %vm472
    %v474 = vsel %vm473, %v466, %v470
    %v475 = vand.u32 2147483647, %v374
    %vm476 = vcmp.eq.f32.partialorder %v475, 8.507059e+37
    %v477 = vand.u32 %v374, 2147483648
    %v478 = vor.u32 1.1754944e-38, %v477
    %v479 = vsel %vm476, %v478, %v474
    %v480 = vmul.f32 1.0, %v479
    %v481 = vrcp.pop %v375
    %v482 = vmul.f32 %v375, %v481
    %v483 = vsub.f32 1.0, %v482
    %v484 = vmul.f32 %v481, %v483
    %v485 = vadd.f32 %v481, %v484
    %vm486 = vweird.f32 %v375
    %vm487 = vweird.f32 %v481
    %vm488 = vmor %vm486, %vm487
    %v489 = vsel %vm488, %v481, %v485
    %v490 = vand.u32 2147483647, %v375
    %vm491 = vcmp.eq.f32.partialorder %v490, 8.507059e+37
    %v492 = vand.u32 %v375, 2147483648
    %v493 = vor.u32 1.1754944e-38, %v492
    %v494 = vsel %vm491, %v493, %v489
    %v495 = vmul.f32 1.0, %v494
    %v496 = vmul.f32 %v278, %v390
    %v497 = vmul.f32 %v297, %v405
    %v498 = vmul.f32 %v280, %v420
    %v499 = vmul.f32 %v299, %v435
    %v500 = vmul.f32 %v283, %v450
    %v501 = vmul.f32 %v302, %v465
    %v502 = vmul.f32 %v285, %v480
    %v503 = vmul.f32 %v304, %v495
    %v504 = vmul.f32 %v496, %v316
    %v505 = vmul.f32 %v497, %v335
    %v506 = vmul.f32 %v498, %v318
    %v507 = vmul.f32 %v499, %v337
    %v508 = vmul.f32 %v500, %v321
    %v509 = vmul.f32 %v501, %v340
    %v510 = vmul.f32 %v502, %v323
    %v511 = vmul.f32 %v503, %v342
    %v512 = vld [vmem:[#allocation2] sm:$0xff]
    %v513 = vld [vmem:[#allocation2 + $0x8] sm:$0xff]
    %v514 = vld [vmem:[#allocation2 + $0x10] sm:$0xff]
    %v515 = vld [vmem:[#allocation2 + $0x18] sm:$0xff]
    %v516 = vpack.c.bf16 %v506, %v504
    %v517 = vpack.c.bf16 %v507, %v505
    %v518 = vpack.c.bf16 %v510, %v508
    %v519 = vpack.c.bf16 %v511, %v509
    %v520 = vld [vmem:[#allocation8] sm:$0xf]
    %v521 = vld [vmem:[#allocation8 + $0x4] sm:$0xf]
    %v522 = vld [vmem:[#allocation8 + $0x8] sm:$0xf]
    %v523 = vld [vmem:[#allocation8 + $0xc] sm:$0xf]
    %v524 = vld [vmem:[#allocation8 + $0x10] sm:$0xf]
    %v525 = vld [vmem:[#allocation8 + $0x14] sm:$0xf]
    %v526 = vld [vmem:[#allocation8 + $0x18] sm:$0xf]
    %v527 = vld [vmem:[#allocation8 + $0x1c] sm:$0xf]
    %v528 = vld [vmem:[#allocation8 + $0x20] sm:$0xf]
    %v529 = vld [vmem:[#allocation8 + $0x24] sm:$0xf]
    %v530 = vld [vmem:[#allocation8 + $0x28] sm:$0xf]
    %v531 = vld [vmem:[#allocation8 + $0x2c] sm:$0xf]
    %v532 = vld [vmem:[#allocation8 + $0x30] sm:$0xf]
    %v533 = vld [vmem:[#allocation8 + $0x34] sm:$0xf]
    %v534 = vld [vmem:[#allocation8 + $0x38] sm:$0xf]
    %v535 = vld [vmem:[#allocation8 + $0x3c] sm:$0xf]
    %v536 = vld [vmem:[#allocation8 + $0x40] sm:$0xf]
    %v537 = vld [vmem:[#allocation8 + $0x44] sm:$0xf]
    %v538 = vld [vmem:[#allocation8 + $0x48] sm:$0xf]
    %v539 = vld [vmem:[#allocation8 + $0x4c] sm:$0xf]
    %v540 = vld [vmem:[#allocation8 + $0x50] sm:$0xf]
    %v541 = vld [vmem:[#allocation8 + $0x54] sm:$0xf]
    %v542 = vld [vmem:[#allocation8 + $0x58] sm:$0xf]
    %v543 = vld [vmem:[#allocation8 + $0x5c] sm:$0xf]
    %v544 = vld [vmem:[#allocation8 + $0x60] sm:$0xf]
    %v545 = vld [vmem:[#allocation8 + $0x64] sm:$0xf]
    %v546 = vld [vmem:[#allocation8 + $0x68] sm:$0xf]
    %v547 = vld [vmem:[#allocation8 + $0x6c] sm:$0xf]
    %v548 = vld [vmem:[#allocation8 + $0x70] sm:$0xf]
    %v549 = vld [vmem:[#allocation8 + $0x74] sm:$0xf]
    %v550 = vld [vmem:[#allocation8 + $0x78] sm:$0xf]
    %v551 = vld [vmem:[#allocation8 + $0x7c] sm:$0xf]
    %v584 = vunpack.c.l.b16 %v520
    %v585 = vunpack.c.l.b16 %v521
    %v586 = vunpack.c.l.b16 %v522
    %v587 = vunpack.c.l.b16 %v523
    %v588 = vunpack.c.l.b16 %v524
    %v589 = vunpack.c.l.b16 %v525
    %v590 = vunpack.c.l.b16 %v526
    %v591 = vunpack.c.l.b16 %v527
    %v592 = vunpack.c.l.b16 %v528
    %v593 = vunpack.c.l.b16 %v529
    %v594 = vunpack.c.l.b16 %v530
    %v595 = vunpack.c.l.b16 %v531
    %v596 = vunpack.c.l.b16 %v532
    %v597 = vunpack.c.l.b16 %v533
    %v598 = vunpack.c.l.b16 %v534
    %v599 = vunpack.c.l.b16 %v535
    %v600 = vunpack.c.l.b16 %v536
    %v601 = vunpack.c.l.b16 %v537
    %v602 = vunpack.c.l.b16 %v538
    %v603 = vunpack.c.l.b16 %v539
    %v604 = vunpack.c.l.b16 %v540
    %v605 = vunpack.c.l.b16 %v541
    %v606 = vunpack.c.l.b16 %v542
    %v607 = vunpack.c.l.b16 %v543
    %v608 = vunpack.c.l.b16 %v544
    %v609 = vunpack.c.l.b16 %v545
    %v610 = vunpack.c.l.b16 %v546
    %v611 = vunpack.c.l.b16 %v547
    %v612 = vunpack.c.l.b16 %v548
    %v613 = vunpack.c.l.b16 %v549
    %v614 = vunpack.c.l.b16 %v550
    %v615 = vunpack.c.l.b16 %v551
    %v616 = vpack.c.b16 %v585, %v584
    %v617 = vpack.c.b16 %v587, %v586
    %v618 = vpack.c.b16 %v589, %v588
    %v619 = vpack.c.b16 %v591, %v590
    %v620 = vpack.c.b16 %v593, %v592
    %v621 = vpack.c.b16 %v595, %v594
    %v622 = vpack.c.b16 %v597, %v596
    %v623 = vpack.c.b16 %v599, %v598
    %v624 = vpack.c.b16 %v601, %v600
    %v625 = vpack.c.b16 %v603, %v602
    %v626 = vpack.c.b16 %v605, %v604
    %v627 = vpack.c.b16 %v607, %v606
    %v628 = vpack.c.b16 %v609, %v608
    %v629 = vpack.c.b16 %v611, %v610
    %v630 = vpack.c.b16 %v613, %v612
    %v631 = vpack.c.b16 %v615, %v614
    %648 = vmatpush.bf16.msra.mxu0 %v623
    %649 = vmatpush.bf16.msra.mxu0 %v622
    %650 = vmatpush.bf16.msra.mxu0 %v621
    %651 = vmatpush.bf16.msra.mxu0 %v620
    %652 = vmatpush.bf16.msra.mxu0 %v619
    %653 = vmatpush.bf16.msra.mxu0 %v618
    %654 = vmatpush.bf16.msra.mxu0 %v617
    %655 = vmatpush.bf16.msra.mxu0 %v616
    %656 = vmatmul.bf16.gmra.mxu0 %v516
    %v657 = vpop.f32.mrf.mxu0
    %v658 = vadd.f32 0.0, %v657
    %v659 = vpop.f32.mrf.mxu0
    %v660 = vadd.f32 0.0, %v659
    %661 = vmatmul.bf16.gmra.mxu0 %v518
    %v662 = vpop.f32.mrf.mxu0
    %v663 = vadd.f32 0.0, %v662
    %v664 = vpop.f32.mrf.mxu0
    %v665 = vadd.f32 0.0, %v664
    %666 = vdwg.mxu0
    %667 = vmatpush.bf16.msra.mxu0 %v631
    %668 = vmatpush.bf16.msra.mxu0 %v630
    %669 = vmatpush.bf16.msra.mxu0 %v629
    %670 = vmatpush.bf16.msra.mxu0 %v628
    %671 = vmatpush.bf16.msra.mxu0 %v627
    %672 = vmatpush.bf16.msra.mxu0 %v626
    %673 = vmatpush.bf16.msra.mxu0 %v625
    %674 = vmatpush.bf16.msra.mxu0 %v624
    %675 = vmatmul.bf16.gmra.mxu0 %v517
    %v676 = vpop.f32.mrf.mxu0
    %v677 = vadd.f32 %v658, %v676
    %v678 = vpop.f32.mrf.mxu0
    %v679 = vadd.f32 %v660, %v678
    %680 = vmatmul.bf16.gmra.mxu0 %v519
    %v681 = vpop.f32.mrf.mxu0
    %v682 = vadd.f32 %v663, %v681
    %v683 = vpop.f32.mrf.mxu0
    %v684 = vadd.f32 %v665, %v683
    %685 = vdwg.mxu0
    %v686 = vadd.f32 %v512, %v677
    %v687 = vadd.f32 %v513, %v679
    %v688 = vadd.f32 %v514, %v682
    %v689 = vadd.f32 %v515, %v684
    %690 = vst [vmem:[#allocation2] sm:$0xff] %v686
    %691 = vst [vmem:[#allocation2 + $0x8] sm:$0xff] %v687
    %692 = vst [vmem:[#allocation2 + $0x10] sm:$0xff] %v688
    %693 = vst [vmem:[#allocation2 + $0x18] sm:$0xff] %v689
    // Predicated region
    $region30: #{_mlp_forward_impl.1} parent=1 // pred_check
      %p694 = pneg %p62
    $region31: #{_mlp_forward_impl.1} parent=1 // pred_check_branch
      %696 = sbr.rel (%p694) target = $region33
    $region32: #{_mlp_forward_impl.1} parent=1 // pred_region
      %v697 = vld [vmem:[#allocation2] sm:$0xff]
      %v698 = vld [vmem:[#allocation2 + $0x8] sm:$0xff]
      %v699 = vld [vmem:[#allocation2 + $0x10] sm:$0xff]
      %v700 = vld [vmem:[#allocation2 + $0x18] sm:$0xff]
      %701 = vst [vmem:[#allocation9] sm:$0xff] %v697
      %702 = vst [vmem:[#allocation9 + $0x8] sm:$0xff] %v698
      %703 = vst [vmem:[#allocation9 + $0x10] sm:$0xff] %v699
      %704 = vst [vmem:[#allocation9 + $0x18] sm:$0xff] %v700
    $region33: #{_mlp_forward_impl.1} parent=1 // pred_fallthru
      _
    // Predicated region
    $region34: #{_mlp_forward_impl.1} parent=1 // pred_check
      _
    $region35: #{_mlp_forward_impl.1} parent=1 // pred_check_branch
      %706 = sbr.rel (0) target = $region37
    $region36: #{_mlp_forward_impl.1} parent=1 // pred_region
      %708 = vsyncadd [#allocation5], 0
      %s709 = sshll.u32 [#allocation9], 4
      %s710 = int_to_ptr.vmem [resolvable:$true] %s709
      %s711 = sshll.u32 %s3, 4
      %s712 = int_to_ptr.hbm [resolvable:$true] %s711
      %717 = dma.vmem_to_hbm [thread:$0]  %s710, 512, %s712, [#allocation5], 128, 128, 8
    $region37: #{_mlp_forward_impl.1} parent=1 // pred_fallthru
      _
    // Predicated region
    $region38: #{_mlp_forward_impl.1} parent=1 // pred_check
      _
    $region39: #{_mlp_forward_impl.1} parent=1 // pred_check_branch
      %719 = sbr.rel (0) target = $region41
    $region40: #{_mlp_forward_impl.1} parent=1 // pred_region
      %721 = dma.done [#allocation5], 512
    $region41: #{_mlp_forward_impl.1} parent=1 // pred_fallthru
      _
    %722 = vsyncpa [#allocation4], 1
    %723 = vsyncpa [#allocation7], 1
    %724 = vsyncpa [#allocation5], 1

</llo_original>
